<compile_context>
chip_gen: v5e
topology: v5e:2x2
jax: 0.10.0
libtpu: 0.0.40
codegen_flags: <defaults>
</compile_context>

<pallas_src>
import jax
import jax.numpy as jnp
from jax import lax
from jax.experimental import pallas as pl
from jax.experimental.pallas import tpu as pltpu


def _round_up(n, m):
    return ((n + m - 1) // m) * m


# ----------------------------------------------------------------------------
# Kernels
# ----------------------------------------------------------------------------
def _rnn_step_kernel(x_ref, h0_ref,
                     w_x_ref, b_x_ref,
                     w_hh_ref, b_hh_ref,
                     w_dec_ref, b_dec_ref,
                     out_ref, h_new_ref):
    """Single GRU step (i2h fused into the input gate projection).

    Shapes are padded: BP = multiple of 8 sublanes, HP/OP = multiples of 128
    lanes, so every slice is vreg-aligned and every store is unmasked.
    """
    HP = h0_ref.shape[1]

    x = x_ref[...]
    h0 = h0_ref[...]

    # Fused i2h + GRU input projection (one matmul instead of two).
    gi = jnp.dot(x, w_x_ref[...], preferred_element_type=jnp.float32) + b_x_ref[...]
    # Recurrent projection.
    gh = jnp.dot(h0, w_hh_ref[...], preferred_element_type=jnp.float32) + b_hh_ref[...]

    # Gate order [r, z, n]; r and z share one fused sigmoid over 2*HP lanes.
    rz = jax.nn.sigmoid(gi[:, :2 * HP] + gh[:, :2 * HP])
    r = rz[:, :HP]
    z = rz[:, HP:]
    n = jnp.tanh(gi[:, 2 * HP:] + r * gh[:, 2 * HP:])
    h_new = (1.0 - z) * n + z * h0  # padded lanes stay exactly 0 (zero-padded h0/weights)

    # Decoder (lane-padded to OP -> unmasked store).
    out = jnp.dot(h_new, w_dec_ref[...], preferred_element_type=jnp.float32) + b_dec_ref[...]

    out_ref[...] = out.astype(out_ref.dtype)
    h_new_ref[...] = h_new.astype(h_new_ref.dtype)


def _gru_seq_decode_kernel(gi_ref, h0_ref,
                           w_hh_ref, b_hh_ref,
                           w_dec_ref, b_dec_ref,
                           out_ref, h_fin_ref,
                           h_all):
    """Whole recurrence in one invocation.

    gi_ref: (T, BP, 3*HP) precomputed input-side gate projections (hoisted).
    The serial loop only carries the recurrent matmul + gate math; the decoder
    runs once after the loop as a single batched (T*BP, HP) matmul.
    """
    T, BP, _ = gi_ref.shape
    HP = h0_ref.shape[1]
    OP = out_ref.shape[2]

    w_hh = w_hh_ref[...]
    b_hh = b_hh_ref[...]

    def step(t, h):
        gi = gi_ref[t]                                                    # (BP, 3*HP)
        gh = jnp.dot(h, w_hh, preferred_element_type=jnp.float32) + b_hh  # (BP, 3*HP)
        rz = jax.nn.sigmoid(gi[:, :2 * HP] + gh[:, :2 * HP])              # fused r,z
        r = rz[:, :HP]
        z = rz[:, HP:]
        n = jnp.tanh(gi[:, 2 * HP:] + r * gh[:, 2 * HP:])
        h_new = (1.0 - z) * n + z * h
        h_all[t] = h_new
        return h_new

    h_fin = lax.fori_loop(0, T, step, h0_ref[...], unroll=True)
    h_fin_ref[...] = h_fin.astype(h_fin_ref.dtype)

    # Decoder hoisted off the serial chain: one MXU-efficient batched matmul.
    h_flat = h_all[...].reshape(T * BP, HP)
    out = (jnp.dot(h_flat, w_dec_ref[...], preferred_element_type=jnp.float32)
           + b_dec_ref[...])
    out_ref[...] = out.reshape(T, BP, OP).astype(out_ref.dtype)


# ----------------------------------------------------------------------------
# Parameter handling
# ----------------------------------------------------------------------------
def init_params(key, input_size, cond_size, hidden_size, output_size):
    """Raw (unfused, unpadded) params in PyTorch-equivalent transposed layout."""
    ks = jax.random.split(key, 8)
    scale = 0.1
    I = input_size + cond_size
    H = hidden_size
    O = output_size
    return {
        # Linear i2h: stored as (in, out) = W^T relative to PyTorch.
        "w_i2h": scale * jax.random.normal(ks[0], (I, H), jnp.float32),
        "b_i2h": scale * jax.random.normal(ks[1], (1, H), jnp.float32),
        # GRU weight_ih_l0^T: (H, 3H), gate order [r, z, n].
        "w_ih": scale * jax.random.normal(ks[2], (H, 3 * H), jnp.float32),
        "b_ih": scale * jax.random.normal(ks[3], (1, 3 * H), jnp.float32),
        # GRU weight_hh_l0^T: (H, 3H).
        "w_hh": scale * jax.random.normal(ks[4], (H, 3 * H), jnp.float32),
        "b_hh": scale * jax.random.normal(ks[5], (1, 3 * H), jnp.float32),
        # decoder: (H, O).
        "w_dec": scale * jax.random.normal(ks[6], (H, O), jnp.float32),
        "b_dec": scale * jax.random.normal(ks[7], (1, O), jnp.float32),
    }


def pack_params(p):
    """Fuse i2h into the GRU input projection and pad gates/outputs to 128 lanes.

    Callers must pass UNPADDED hidden state to the wrappers; the zero-padding
    of h0 / weight pad rows+cols is what keeps padded lanes exactly 0.
    """
    I, H = p["w_i2h"].shape
    O = p["w_dec"].shape[1]
    HP = _round_up(H, 128)
    OP = _round_up(O, 128)
    hi = jax.lax.Precision.HIGHEST

    # Exact algebraic fusion (no nonlinearity between i2h and GRU input matmul).
    w_x = jnp.dot(p["w_i2h"], p["w_ih"], precision=hi)                 # (I, 3H)
    b_x = jnp.dot(p["b_i2h"], p["w_ih"], precision=hi) + p["b_ih"]     # (1, 3H)

    def pad_gate_cols(w):
        # (rows, 3H) -> (rows, 3*HP), each gate block zero-padded to HP lanes.
        return jnp.concatenate(
            [jnp.pad(w[:, g * H:(g + 1) * H], ((0, 0), (0, HP - H))) for g in range(3)],
            axis=1)

    def pad_rows(w):
        return jnp.pad(w, ((0, HP - w.shape[0]), (0, 0)))

    return {
        "w_x": pad_gate_cols(w_x),                               # (I, 3*HP)
        "b_x": pad_gate_cols(b_x),                               # (1, 3*HP)
        "w_hh": pad_rows(pad_gate_cols(p["w_hh"])),              # (HP, 3*HP)
        "b_hh": pad_gate_cols(p["b_hh"]),                        # (1, 3*HP)
        "w_dec": pad_rows(jnp.pad(p["w_dec"], ((0, 0), (0, OP - O)))),  # (HP, OP)
        "b_dec": jnp.pad(p["b_dec"], ((0, 0), (0, OP - O))),     # (1, OP)
        # Static meta (used only in Python wrappers).
        "I": I, "H": H, "O": O, "HP": HP, "OP": OP,
    }


# ----------------------------------------------------------------------------
# Wrappers
# ----------------------------------------------------------------------------
def rnn_forward(x, hidden, kp):
    """Single-step forward (matches the PyTorch module's forward).

    x: (B, input_size + cond_size); hidden: (n_layers=1, B, hidden_size).
    Returns (output (B, O), hidden (1, B, H)).

    Note: for host-side decode loops, prefer rnn_forward_seq — the single-step
    path pays kernel launch + weight DMA every call.
    """
    B = x.shape[0]
    H, O = kp["H"], kp["O"]
    HP, OP = kp["HP"], kp["OP"]
    BP = _round_up(B, 8)                              # sublane-pad batch

    x_p = jnp.pad(x, ((0, BP - B), (0, 0)))
    h0_p = jnp.pad(hidden[0], ((0, BP - B), (0, HP - H)))

    vmem = pltpu.MemorySpace.VMEM
    spec = pl.BlockSpec(memory_space=vmem)

    outp, h_newp = pl.pallas_call(
        _rnn_step_kernel,
        out_shape=(
            jax.ShapeDtypeStruct((BP, OP), jnp.float32),
            jax.ShapeDtypeStruct((BP, HP), jnp.float32),
        ),
        in_specs=[spec] * 8,
        out_specs=(spec, spec),
    )(x_p, h0_p,
      kp["w_x"], kp["b_x"],
      kp["w_hh"], kp["b_hh"],
      kp["w_dec"], kp["b_dec"])

    # Strip sublane/lane padding; restore PyTorch GRU hidden shape (1, B, H).
    return outp[:B, :O], h_newp[:B, :H][None, :, :]


def rnn_forward_seq(xs, hidden, kp):
    """Sequence forward: equivalent to calling the module forward T times,
    feeding `hidden` back each step — recurrence runs inside ONE Pallas kernel
    (fori_loop over T, weights VMEM-resident, decoder hoisted after the loop).

    xs: (T, B, input_size + cond_size); hidden: (1, B, H).
    Returns (outputs (T, B, O), hidden (1, B, H)).
    """
    T, B, I = xs.shape
    H, O = kp["H"], kp["O"]
    HP, OP = kp["HP"], kp["OP"]
    BP = _round_up(B, 8)
    G3 = 3 * HP
    hi = jax.lax.Precision.HIGHEST  # one-shot batched matmul off the critical path

    # Sublane-pad batch; lane-pad hidden.
    xs_p = jnp.pad(xs, ((0, 0), (0, BP - B), (0, 0)))
    h0_p = jnp.pad(hidden[0], ((0, BP - B), (0, HP - H)))

    # Hoist the input-side gate projection out of the recurrence:
    # one large (T*BP, I) @ (I, 3*HP) matmul instead of T tiny ones.
    gi_all = (jnp.dot(xs_p.reshape(T * BP, I), kp["w_x"], precision=hi)
              + kp["b_x"]).reshape(T, BP, G3)

    vmem = pltpu.MemorySpace.VMEM
    spec = pl.BlockSpec(memory_space=vmem)

    out_all, h_fin = pl.pallas_call(
        _gru_seq_decode_kernel,
        out_shape=(
            jax.ShapeDtypeStruct((T, BP, OP), jnp.float32),
            jax.ShapeDtypeStruct((BP, HP), jnp.float32),
        ),
        in_specs=[spec] * 6,
        out_specs=(spec, spec),
        scratch_shapes=[pltpu.VMEM((T, BP, HP), jnp.float32)],
    )(gi_all, h0_p, kp["w_hh"], kp["b_hh"], kp["w_dec"], kp["b_dec"])

    return out_all[:, :B, :O], h_fin[:B, :H][None, :, :]


# ----------------------------------------------------------------------------
# Pure-JAX references (mirror the PyTorch forward, unfused / unpadded)
# ----------------------------------------------------------------------------
def _reference_step(x, hidden, p):
    H = p["w_hh"].shape[0]
    hi = jax.lax.Precision.HIGHEST
    h0 = hidden[0]
    h1 = jnp.dot(x, p["w_i2h"], precision=hi) + p["b_i2h"]
    gi = jnp.dot(h1, p["w_ih"], precision=hi) + p["b_ih"]
    gh = jnp.dot(h0, p["w_hh"], precision=hi) + p["b_hh"]
    r = jax.nn.sigmoid(gi[:, :H] + gh[:, :H])
    z = jax.nn.sigmoid(gi[:, H:2 * H] + gh[:, H:2 * H])
    n = jnp.tanh(gi[:, 2 * H:] + r * gh[:, 2 * H:])
    h_new = (1.0 - z) * n + z * h0
    out = jnp.dot(h_new, p["w_dec"], precision=hi) + p["b_dec"]
    return out, h_new[None]


def _reference_seq(xs, hidden, p):
    outs = []
    h = hidden
    for t in range(xs.shape[0]):
        o, h = _reference_step(xs[t], h, p)
        outs.append(o)
    return jnp.stack(outs, axis=0), h


# ----------------------------------------------------------------------------
if __name__ == "__main__":
    input_size, cond_size, hidden_size, output_size = 16, 16, 32, 8
    batch, n_layers, seq_len = 2, 1, 8

    key = jax.random.PRNGKey(0)
    k_param, k_x, k_xs = jax.random.split(key, 3)
    raw_params = init_params(k_param, input_size, cond_size, hidden_size, output_size)
    packed = pack_params(raw_params)

    # --- single-step forward (matches the PyTorch module forward) ---
    x = jax.random.normal(k_x, (batch, input_size + cond_size), jnp.float32)
    hidden = jnp.zeros((n_layers, batch, hidden_size), jnp.float32)  # init_hidden

    out, h_new = rnn_forward(x, hidden, packed)
    jax.block_until_ready((out, h_new))

    ref_out, ref_h = _reference_step(x, hidden, raw_params)
    assert out.shape == (batch, output_size)
    assert h_new.shape == (n_layers, batch, hidden_size)
    # i2h->GRU fusion reassociates fp32 sums -> allow ~1e-6-level drift.
    assert jnp.allclose(out, ref_out, atol=1e-4, rtol=1e-4)
    assert jnp.allclose(h_new, ref_h, atol=1e-4, rtol=1e-4)

    # --- sequence forward (recurrence inside one kernel invocation) ---
    xs = jax.random.normal(k_xs, (seq_len, batch, input_size + cond_size), jnp.float32)
    outs, h_fin = rnn_forward_seq(xs, hidden, packed)
    jax.block_until_ready((outs, h_fin))

    ref_outs, ref_hfin = _reference_seq(xs, hidden, raw_params)
    assert outs.shape == (seq_len, batch, output_size)
    assert h_fin.shape == (n_layers, batch, hidden_size)
    assert jnp.allclose(outs, ref_outs, atol=1e-4, rtol=1e-4)
    assert jnp.allclose(h_fin, ref_hfin, atol=1e-4, rtol=1e-4)

    print("KERNEL_OK")
</pallas_src>

<mosaic_0001>
module attributes {stable_mosaic.version = 11 : i64} {
  func.func @_rnn_step_kernel(%arg0: memref<8x32xf32, #tpu.memory_space<vmem>>, %arg1: memref<8x128xf32, #tpu.memory_space<vmem>>, %arg2: memref<32x384xf32, #tpu.memory_space<vmem>>, %arg3: memref<1x384xf32, #tpu.memory_space<vmem>>, %arg4: memref<128x384xf32, #tpu.memory_space<vmem>>, %arg5: memref<1x384xf32, #tpu.memory_space<vmem>>, %arg6: memref<128x128xf32, #tpu.memory_space<vmem>>, %arg7: memref<1x128xf32, #tpu.memory_space<vmem>>, %arg8: memref<8x128xf32, #tpu.memory_space<vmem>>, %arg9: memref<8x128xf32, #tpu.memory_space<vmem>>) attributes {dimension_semantics = [], scalar_prefetch = 0 : i64, scratch_operands = 0 : i64, tpu.core_type = #tpu.core_type<tc>} {
    %c0 = arith.constant 0 : index
    %c0_0 = arith.constant 0 : index
    %0 = vector.load %arg0[%c0, %c0_0] : memref<8x32xf32, #tpu.memory_space<vmem>>, vector<8x32xf32>
    %c0_1 = arith.constant 0 : index
    %c0_2 = arith.constant 0 : index
    %1 = vector.load %arg1[%c0_1, %c0_2] : memref<8x128xf32, #tpu.memory_space<vmem>>, vector<8x128xf32>
    %c0_3 = arith.constant 0 : index
    %c0_4 = arith.constant 0 : index
    %2 = vector.load %arg2[%c0_3, %c0_4] : memref<32x384xf32, #tpu.memory_space<vmem>>, vector<32x384xf32>
    %cst = arith.constant dense<0.000000e+00> : vector<8x384xf32>
    %3 = tpu.matmul %0, %2, %cst {dimension_numbers = #tpu.dot_dimension_numbers<[1], [0], [0], [1], [0, 0, 1, 1], [], []>} : vector<8x32xf32>, vector<32x384xf32>, vector<8x384xf32> -> vector<8x384xf32>
    %c0_5 = arith.constant 0 : index
    %c0_6 = arith.constant 0 : index
    %4 = vector.load %arg3[%c0_5, %c0_6] : memref<1x384xf32, #tpu.memory_space<vmem>>, vector<1x384xf32>
    %5 = vector.broadcast %4 : vector<1x384xf32> to vector<8x384xf32>
    %6 = arith.addf %3, %5 : vector<8x384xf32>
    %c0_7 = arith.constant 0 : index
    %c0_8 = arith.constant 0 : index
    %7 = vector.load %arg4[%c0_7, %c0_8] : memref<128x384xf32, #tpu.memory_space<vmem>>, vector<128x384xf32>
    %cst_9 = arith.constant dense<0.000000e+00> : vector<8x384xf32>
    %8 = tpu.matmul %1, %7, %cst_9 {dimension_numbers = #tpu.dot_dimension_numbers<[1], [0], [0], [1], [0, 0, 1, 1], [], []>} : vector<8x128xf32>, vector<128x384xf32>, vector<8x384xf32> -> vector<8x384xf32>
    %c0_10 = arith.constant 0 : index
    %c0_11 = arith.constant 0 : index
    %9 = vector.load %arg5[%c0_10, %c0_11] : memref<1x384xf32, #tpu.memory_space<vmem>>, vector<1x384xf32>
    %10 = vector.broadcast %9 : vector<1x384xf32> to vector<8x384xf32>
    %11 = arith.addf %8, %10 : vector<8x384xf32>
    %12 = vector.extract_strided_slice %6 {offsets = [0, 0], sizes = [8, 256], strides = [1, 1]} : vector<8x384xf32> to vector<8x256xf32>
    %13 = vector.extract_strided_slice %11 {offsets = [0, 0], sizes = [8, 256], strides = [1, 1]} : vector<8x384xf32> to vector<8x256xf32>
    %14 = arith.addf %12, %13 : vector<8x256xf32>
    %15 = arith.negf %14 : vector<8x256xf32>
    %16 = math.exp %15 : vector<8x256xf32>
    %cst_12 = arith.constant 1.000000e+00 : f32
    %17 = vector.broadcast %cst_12 : f32 to vector<8x256xf32>
    %18 = arith.addf %17, %16 : vector<8x256xf32>
    %19 = arith.divf %17, %18 : vector<8x256xf32>
    %20 = vector.extract_strided_slice %19 {offsets = [0, 0], sizes = [8, 128], strides = [1, 1]} : vector<8x256xf32> to vector<8x128xf32>
    %21 = vector.extract_strided_slice %19 {offsets = [0, 128], sizes = [8, 128], strides = [1, 1]} : vector<8x256xf32> to vector<8x128xf32>
    %22 = vector.extract_strided_slice %6 {offsets = [0, 256], sizes = [8, 128], strides = [1, 1]} : vector<8x384xf32> to vector<8x128xf32>
    %23 = vector.extract_strided_slice %11 {offsets = [0, 256], sizes = [8, 128], strides = [1, 1]} : vector<8x384xf32> to vector<8x128xf32>
    %24 = arith.mulf %20, %23 : vector<8x128xf32>
    %25 = arith.addf %22, %24 : vector<8x128xf32>
    %26 = math.tanh %25 : vector<8x128xf32>
    %cst_13 = arith.constant 1.000000e+00 : f32
    %27 = vector.broadcast %cst_13 : f32 to vector<8x128xf32>
    %28 = arith.subf %27, %21 : vector<8x128xf32>
    %29 = arith.mulf %28, %26 : vector<8x128xf32>
    %30 = arith.mulf %21, %1 : vector<8x128xf32>
    %31 = arith.addf %29, %30 : vector<8x128xf32>
    %c0_14 = arith.constant 0 : index
    %c0_15 = arith.constant 0 : index
    %32 = vector.load %arg6[%c0_14, %c0_15] : memref<128x128xf32, #tpu.memory_space<vmem>>, vector<128x128xf32>
    %cst_16 = arith.constant dense<0.000000e+00> : vector<8x128xf32>
    %33 = tpu.matmul %31, %32, %cst_16 {dimension_numbers = #tpu.dot_dimension_numbers<[1], [0], [0], [1], [0, 0, 1, 1], [], []>} : vector<8x128xf32>, vector<128x128xf32>, vector<8x128xf32> -> vector<8x128xf32>
    %c0_17 = arith.constant 0 : index
    %c0_18 = arith.constant 0 : index
    %34 = vector.load %arg7[%c0_17, %c0_18] : memref<1x128xf32, #tpu.memory_space<vmem>>, vector<1x128xf32>
    %35 = vector.broadcast %34 : vector<1x128xf32> to vector<8x128xf32>
    %36 = arith.addf %33, %35 : vector<8x128xf32>
    %c0_19 = arith.constant 0 : index
    %c0_20 = arith.constant 0 : index
    %37 = vector.load %arg8[%c0_19, %c0_20] : memref<8x128xf32, #tpu.memory_space<vmem>>, vector<8x128xf32>
    tpu.vector_store %arg8[%c0_19, %c0_20], %36 {strides = array<i32>} : memref<8x128xf32, #tpu.memory_space<vmem>>, vector<8x128xf32>,
    %c0_21 = arith.constant 0 : index
    %c0_22 = arith.constant 0 : index
    %38 = vector.load %arg9[%c0_21, %c0_22] : memref<8x128xf32, #tpu.memory_space<vmem>>, vector<8x128xf32>
    tpu.vector_store %arg9[%c0_21, %c0_22], %31 {strides = array<i32>} : memref<8x128xf32, #tpu.memory_space<vmem>>, vector<8x128xf32>,
    return
  }
}

</mosaic_0001>

<llo_original>
// kernel: tpu_custom_call.1
$region0: #{tpu_custom_call.1}
  #allocation0 [shape = 'u32[]', space=smem, size = 0x4, offset = 0x4, fixed_abs, tag = 'smem constant byte address 0x4 - core index']
  #allocation1 [shape = 'u32[72,128]{1,0:T(1,128)}', space=vmem, size = 0x9000, scoped, tag = 'internal scratch']
  %s0 = inlined_call_operand.hbm [shape: f32[8,32], index: 0, kind: input, shape index: {}]
  %s1 = inlined_call_operand.hbm [shape: f32[8,128], index: 1, kind: input, shape index: {}]
  %s2 = inlined_call_operand.hbm [shape: f32[32,384], index: 2, kind: input, shape index: {}]
  %s3 = inlined_call_operand.hbm [shape: f32[1,384], index: 3, kind: input, shape index: {}]
  %s4 = inlined_call_operand.hbm [shape: f32[128,384], index: 4, kind: input, shape index: {}]
  %s5 = inlined_call_operand.vmem [shape: f32[1,384], index: 5, kind: input, shape index: {}]
  %s6 = inlined_call_operand.hbm [shape: f32[128,128], index: 6, kind: input, shape index: {}]
  %s7 = inlined_call_operand.vmem [shape: f32[1,128], index: 7, kind: input, shape index: {}]
  %s8 = inlined_call_operand.hbm [shape: f32[8,128], index: 8, kind: output, shape index: {0}]
  %s9 = inlined_call_operand.hbm [shape: f32[8,128], index: 9, kind: output, shape index: {1}]
  %10 = xla_tuple %s8, %s9
  %s11 = sld [smem:[#allocation0]]
  $region74: #{tpu_custom_call.1} parent=0
    _
  %s13 = ssub.s32 1, %s11
  %s14 = scalar_select 0, %s13, %s11
  $region1: #{tpu_custom_call.1} parent=0
    #allocation2 [shape = 'u8[4096]{0}', space=vmem, size = 0x1000, scoped, tag = 'input window, operand 0, single buffered']
    #allocation3 [shape = 's32[1]{0}', space=sflag, size = 0x4, scoped, tag = 'scoped memory for tpu_custom_call.1']
    #allocation4 [shape = 's32[1]{0}', space=sflag, size = 0x4, scoped, tag = 'scoped memory for tpu_custom_call.1']
    #allocation5 [shape = 'u8[4096]{0}', space=vmem, size = 0x1000, scoped, tag = 'input window, operand 1, single buffered']
    #allocation6 [shape = 's32[1]{0}', space=sflag, size = 0x4, scoped, tag = 'scoped memory for tpu_custom_call.1']
    #allocation7 [shape = 'u8[49152]{0}', space=vmem, size = 0xc000, scoped, tag = 'input window, operand 2, single buffered']
    #allocation8 [shape = 'u8[1536]{0}', space=vmem, size = 0x800, scoped, tag = 'input window, operand 3, single buffered']
    #allocation9 [shape = 's32[1]{0}', space=sflag, size = 0x4, scoped, tag = 'scoped memory for tpu_custom_call.1']
    #allocation10 [shape = 'u8[196608]{0}', space=vmem, size = 0x30000, scoped, tag = 'input window, operand 4, single buffered']
    #allocation11 [shape = 'u8[65536]{0}', space=vmem, size = 0x10000, scoped, tag = 'input window, operand 6, single buffered']
    #allocation12 [shape = 's32[1]{0}', space=sflag, size = 0x4, scoped, tag = 'scoped memory for tpu_custom_call.1']
    #allocation13 [shape = 'u8[4096]{0}', space=vmem, size = 0x1000, scoped, tag = 'output window, operand 0, single buffered']
    #allocation14 [shape = 'u8[4096]{0}', space=vmem, size = 0x1000, scoped, tag = 'output window, operand 1, single buffered']
    #allocation15 [shape = 's32[1]{0}', space=sflag, size = 0x4, scoped, tag = 'scoped memory for tpu_custom_call.1']
    %15 = vsyncpa [#allocation3], 0
    %16 = vsyncpa [#allocation6], 0
    %17 = vsyncpa [#allocation9], 0
    %18 = vsyncpa [#allocation12], 0
    %19 = vsyncpa [#allocation4], 0
    %20 = vsyncpa [#allocation15], 0
    // Predicated region
    $region2: #{tpu_custom_call.1} parent=1 // pred_check
      _
    $region3: #{tpu_custom_call.1} parent=1 // pred_check_branch
      %22 = sbr.rel (0) target = $region5
    $region4: #{tpu_custom_call.1} parent=1 // pred_region
      %24 = vsyncadd [#allocation3], 0
      %s26 = sshll.u32 %s0, 4
      %s27 = int_to_ptr.hbm [resolvable:$true] %s26
      %s28 = sshll.u32 [#allocation2], 4
      %s29 = int_to_ptr.vmem [resolvable:$true] %s28
      %31 = dma.hbm_to_vmem [thread:$0]  %s27, 128, %s29, [#allocation3]
    $region5: #{tpu_custom_call.1} parent=1 // pred_fallthru
      _
    // Predicated region
    $region6: #{tpu_custom_call.1} parent=1 // pred_check
      _
    $region7: #{tpu_custom_call.1} parent=1 // pred_check_branch
      %33 = sbr.rel (0) target = $region9
    $region8: #{tpu_custom_call.1} parent=1 // pred_region
      %35 = vsyncadd [#allocation6], 0
      %s37 = sshll.u32 %s1, 4
      %s38 = int_to_ptr.hbm [resolvable:$true] %s37
      %s39 = sshll.u32 [#allocation5], 4
      %s40 = int_to_ptr.vmem [resolvable:$true] %s39
      %42 = dma.hbm_to_vmem [thread:$0]  %s38, 128, %s40, [#allocation6]
    $region9: #{tpu_custom_call.1} parent=1 // pred_fallthru
      _
    // Predicated region
    $region10: #{tpu_custom_call.1} parent=1 // pred_check
      _
    $region11: #{tpu_custom_call.1} parent=1 // pred_check_branch
      %44 = sbr.rel (0) target = $region13
    $region12: #{tpu_custom_call.1} parent=1 // pred_region
      %46 = vsyncadd [#allocation6], 0
      %s47 = sshll.u32 %s2, 4
      %s48 = int_to_ptr.hbm [resolvable:$true] %s47
      %s49 = sshll.u32 [#allocation7], 4
      %s50 = int_to_ptr.vmem [resolvable:$true] %s49
      %55 = dma.hbm_to_vmem [thread:$0]  %s48, 1536, %s50, [#allocation6], 384, 384, 24
    $region13: #{tpu_custom_call.1} parent=1 // pred_fallthru
      _
    // Predicated region
    $region14: #{tpu_custom_call.1} parent=1 // pred_check
      _
    $region15: #{tpu_custom_call.1} parent=1 // pred_check_branch
      %57 = sbr.rel (0) target = $region17
    $region16: #{tpu_custom_call.1} parent=1 // pred_region
      %59 = vsyncadd [#allocation9], 0
      %s61 = sshll.u32 %s3, 4
      %s62 = int_to_ptr.hbm [resolvable:$true] %s61
      %s63 = sshll.u32 [#allocation8], 4
      %s64 = int_to_ptr.vmem [resolvable:$true] %s63
      %66 = dma.hbm_to_vmem [thread:$0]  %s62, 48, %s64, [#allocation9]
    $region17: #{tpu_custom_call.1} parent=1 // pred_fallthru
      _
    // Predicated region
    $region18: #{tpu_custom_call.1} parent=1 // pred_check
      _
    $region19: #{tpu_custom_call.1} parent=1 // pred_check_branch
      %68 = sbr.rel (0) target = $region21
    $region20: #{tpu_custom_call.1} parent=1 // pred_region
      %70 = vsyncadd [#allocation9], 0
      %s71 = sshll.u32 %s4, 4
      %s72 = int_to_ptr.hbm [resolvable:$true] %s71
      %s73 = sshll.u32 [#allocation10], 4
      %s74 = int_to_ptr.vmem [resolvable:$true] %s73
      %79 = dma.hbm_to_vmem [thread:$0]  %s72, 6144, %s74, [#allocation9], 384, 384, 24
    $region21: #{tpu_custom_call.1} parent=1 // pred_fallthru
      _
    // Predicated region
    $region22: #{tpu_custom_call.1} parent=1 // pred_check
      _
    $region23: #{tpu_custom_call.1} parent=1 // pred_check_branch
      %81 = sbr.rel (0) target = $region25
    $region24: #{tpu_custom_call.1} parent=1 // pred_region
      _
    $region25: #{tpu_custom_call.1} parent=1 // pred_fallthru
      _
    // Predicated region
    $region26: #{tpu_custom_call.1} parent=1 // pred_check
      _
    $region27: #{tpu_custom_call.1} parent=1 // pred_check_branch
      %83 = sbr.rel (0) target = $region29
    $region28: #{tpu_custom_call.1} parent=1 // pred_region
      %85 = vsyncadd [#allocation12], 0
      %s86 = sshll.u32 %s6, 4
      %s87 = int_to_ptr.hbm [resolvable:$true] %s86
      %s88 = sshll.u32 [#allocation11], 4
      %s89 = int_to_ptr.vmem [resolvable:$true] %s88
      %94 = dma.hbm_to_vmem [thread:$0]  %s87, 2048, %s89, [#allocation12], 128, 128, 8
    $region29: #{tpu_custom_call.1} parent=1 // pred_fallthru
      _
    // Predicated region
    $region30: #{tpu_custom_call.1} parent=1 // pred_check
      _
    $region31: #{tpu_custom_call.1} parent=1 // pred_check_branch
      %96 = sbr.rel (0) target = $region33
    $region32: #{tpu_custom_call.1} parent=1 // pred_region
      _
    $region33: #{tpu_custom_call.1} parent=1 // pred_fallthru
      _
    // Predicated region
    $region34: #{tpu_custom_call.1} parent=1 // pred_check
      _
    $region35: #{tpu_custom_call.1} parent=1 // pred_check_branch
      %98 = sbr.rel (0) target = $region37
    $region36: #{tpu_custom_call.1} parent=1 // pred_region
      %100 = dma.done [#allocation3], 128
    $region37: #{tpu_custom_call.1} parent=1 // pred_fallthru
      _
    // Predicated region
    $region38: #{tpu_custom_call.1} parent=1 // pred_check
      _
    $region39: #{tpu_custom_call.1} parent=1 // pred_check_branch
      %102 = sbr.rel (0) target = $region41
    $region40: #{tpu_custom_call.1} parent=1 // pred_region
      %104 = dma.done [#allocation6], 128
    $region41: #{tpu_custom_call.1} parent=1 // pred_fallthru
      _
    // Predicated region
    $region42: #{tpu_custom_call.1} parent=1 // pred_check
      _
    $region43: #{tpu_custom_call.1} parent=1 // pred_check_branch
      %106 = sbr.rel (0) target = $region45
    $region44: #{tpu_custom_call.1} parent=1 // pred_region
      %108 = dma.done [#allocation6], 1536
    $region45: #{tpu_custom_call.1} parent=1 // pred_fallthru
      _
    // Predicated region
    $region46: #{tpu_custom_call.1} parent=1 // pred_check
      _
    $region47: #{tpu_custom_call.1} parent=1 // pred_check_branch
      %110 = sbr.rel (0) target = $region49
    $region48: #{tpu_custom_call.1} parent=1 // pred_region
      %112 = dma.done [#allocation9], 48
    $region49: #{tpu_custom_call.1} parent=1 // pred_fallthru
      _
    // Predicated region
    $region50: #{tpu_custom_call.1} parent=1 // pred_check
      _
    $region51: #{tpu_custom_call.1} parent=1 // pred_check_branch
      %114 = sbr.rel (0) target = $region53
    $region52: #{tpu_custom_call.1} parent=1 // pred_region
      %116 = dma.done [#allocation9], 6144
    $region53: #{tpu_custom_call.1} parent=1 // pred_fallthru
      _
    // Predicated region
    $region54: #{tpu_custom_call.1} parent=1 // pred_check
      _
    $region55: #{tpu_custom_call.1} parent=1 // pred_check_branch
      %118 = sbr.rel (0) target = $region57
    $region56: #{tpu_custom_call.1} parent=1 // pred_region
      %120 = dma.done [#allocation12], 2048
    $region57: #{tpu_custom_call.1} parent=1 // pred_fallthru
      _
    %v121 = vld [vmem:[#allocation2] sm:$0xff]
    %v122 = vld [vmem:[#allocation5] sm:$0xff]
    %v123 = vld [vmem:[#allocation7] sm:$0xff]
    %v124 = vld [vmem:[#allocation7 + $0x8] sm:$0xff]
    %v125 = vld [vmem:[#allocation7 + $0x10] sm:$0xff]
    %v126 = vld [vmem:[#allocation7 + $0x18] sm:$0xff]
    %v127 = vld [vmem:[#allocation7 + $0x20] sm:$0xff]
    %v128 = vld [vmem:[#allocation7 + $0x28] sm:$0xff]
    %v129 = vld [vmem:[#allocation7 + $0x30] sm:$0xff]
    %v130 = vld [vmem:[#allocation7 + $0x38] sm:$0xff]
    %v131 = vld [vmem:[#allocation7 + $0x40] sm:$0xff]
    %v132 = vld [vmem:[#allocation7 + $0x48] sm:$0xff]
    %v133 = vld [vmem:[#allocation7 + $0x50] sm:$0xff]
    %v134 = vld [vmem:[#allocation7 + $0x58] sm:$0xff]
    %v135 = vld [vmem:[#allocation8] sm:$0x7]
    %v137 = vperm.slane %v135, 0
    %v138 = vperm.slane %v135, 1
    %v139 = vperm.slane %v135, 2
    %vm143 = vcmask 261120
    %v145 = vsel %vm143, %v121, 0
    %147 = vmatpush.msra.mxu0 0.0
    %148 = vmatpush.msra.mxu0 0.0
    %149 = vmatpush.msra.mxu0 0.0
    %150 = vmatpush.msra.mxu0 0.0
    %151 = vmatpush.msra.mxu0 0.0
    %152 = vmatpush.msra.mxu0 0.0
    %153 = vmatpush.msra.mxu0 0.0
    %154 = vmatpush.msra.mxu0 0.0
    %155 = vmatpush.msra.mxu0 0.0
    %156 = vmatpush.msra.mxu0 0.0
    %157 = vmatpush.msra.mxu0 0.0
    %158 = vmatpush.msra.mxu0 0.0
    %159 = vmatpush.msra.mxu0 %v132
    %160 = vmatpush.msra.mxu0 %v129
    %161 = vmatpush.msra.mxu0 %v126
    %162 = vmatpush.msra.mxu0 %v123
    %163 = vmatmul.f32.gmra.mxu0 %v145
    %v164 = vpop.f32.mrf.mxu0
    %v165 = vadd.f32 %v137, %v164
    %166 = vdwg.mxu0
    %167 = vmatpush.msra.mxu0 0.0
    %168 = vmatpush.msra.mxu0 0.0
    %169 = vmatpush.msra.mxu0 0.0
    %170 = vmatpush.msra.mxu0 0.0
    %171 = vmatpush.msra.mxu0 0.0
    %172 = vmatpush.msra.mxu0 0.0
    %173 = vmatpush.msra.mxu0 0.0
    %174 = vmatpush.msra.mxu0 0.0
    %175 = vmatpush.msra.mxu0 0.0
    %176 = vmatpush.msra.mxu0 0.0
    %177 = vmatpush.msra.mxu0 0.0
    %178 = vmatpush.msra.mxu0 0.0
    %179 = vmatpush.msra.mxu0 %v133
    %180 = vmatpush.msra.mxu0 %v130
    %181 = vmatpush.msra.mxu0 %v127
    %182 = vmatpush.msra.mxu0 %v124
    %183 = vmatmul.f32.gmra.mxu0 %v145
    %v184 = vpop.f32.mrf.mxu0
    %v185 = vadd.f32 %v138, %v184
    %186 = vdwg.mxu0
    %187 = vmatpush.msra.mxu0 0.0
    %188 = vmatpush.msra.mxu0 0.0
    %189 = vmatpush.msra.mxu0 0.0
    %190 = vmatpush.msra.mxu0 0.0
    %191 = vmatpush.msra.mxu0 0.0
    %192 = vmatpush.msra.mxu0 0.0
    %193 = vmatpush.msra.mxu0 0.0
    %194 = vmatpush.msra.mxu0 0.0
    %195 = vmatpush.msra.mxu0 0.0
    %196 = vmatpush.msra.mxu0 0.0
    %197 = vmatpush.msra.mxu0 0.0
    %198 = vmatpush.msra.mxu0 0.0
    %199 = vmatpush.msra.mxu0 %v134
    %200 = vmatpush.msra.mxu0 %v131
    %201 = vmatpush.msra.mxu0 %v128
    %202 = vmatpush.msra.mxu0 %v125
    %203 = vmatmul.f32.gmra.mxu0 %v145
    %v204 = vpop.f32.mrf.mxu0
    %v205 = vadd.f32 %v139, %v204
    %206 = vdwg.mxu0
    %v207 = vld [vmem:[#allocation10] sm:$0xff]
    %v208 = vld [vmem:[#allocation10 + $0x8] sm:$0xff]
    %v209 = vld [vmem:[#allocation10 + $0x10] sm:$0xff]
    %v210 = vld [vmem:[#allocation10 + $0x18] sm:$0xff]
    %v211 = vld [vmem:[#allocation10 + $0x20] sm:$0xff]
    %v212 = vld [vmem:[#allocation10 + $0x28] sm:$0xff]
    %v213 = vld [vmem:[#allocation10 + $0x30] sm:$0xff]
    %v214 = vld [vmem:[#allocation10 + $0x38] sm:$0xff]
    %v215 = vld [vmem:[#allocation10 + $0x40] sm:$0xff]
    %v216 = vld [vmem:[#allocation10 + $0x48] sm:$0xff]
    %v217 = vld [vmem:[#allocation10 + $0x50] sm:$0xff]
    %v218 = vld [vmem:[#allocation10 + $0x58] sm:$0xff]
    %v219 = vld [vmem:[#allocation10 + $0x60] sm:$0xff]
    %v220 = vld [vmem:[#allocation10 + $0x68] sm:$0xff]
    %v221 = vld [vmem:[#allocation10 + $0x70] sm:$0xff]
    %v222 = vld [vmem:[#allocation10 + $0x78] sm:$0xff]
    %v223 = vld [vmem:[#allocation10 + $0x80] sm:$0xff]
    %v224 = vld [vmem:[#allocation10 + $0x88] sm:$0xff]
    %v225 = vld [vmem:[#allocation10 + $0x90] sm:$0xff]
    %v226 = vld [vmem:[#allocation10 + $0x98] sm:$0xff]
    %v227 = vld [vmem:[#allocation10 + $0xa0] sm:$0xff]
    %v228 = vld [vmem:[#allocation10 + $0xa8] sm:$0xff]
    %v229 = vld [vmem:[#allocation10 + $0xb0] sm:$0xff]
    %v230 = vld [vmem:[#allocation10 + $0xb8] sm:$0xff]
    %v231 = vld [vmem:[#allocation10 + $0xc0] sm:$0xff]
    %v232 = vld [vmem:[#allocation10 + $0xc8] sm:$0xff]
    %v233 = vld [vmem:[#allocation10 + $0xd0] sm:$0xff]
    %v234 = vld [vmem:[#allocation10 + $0xd8] sm:$0xff]
    %v235 = vld [vmem:[#allocation10 + $0xe0] sm:$0xff]
    %v236 = vld [vmem:[#allocation10 + $0xe8] sm:$0xff]
    %v237 = vld [vmem:[#allocation10 + $0xf0] sm:$0xff]
    %v238 = vld [vmem:[#allocation10 + $0xf8] sm:$0xff]
    %v239 = vld [vmem:[#allocation10 + $0x100] sm:$0xff]
    %v240 = vld [vmem:[#allocation10 + $0x108] sm:$0xff]
    %v241 = vld [vmem:[#allocation10 + $0x110] sm:$0xff]
    %v242 = vld [vmem:[#allocation10 + $0x118] sm:$0xff]
    %v243 = vld [vmem:[#allocation10 + $0x120] sm:$0xff]
    %v244 = vld [vmem:[#allocation10 + $0x128] sm:$0xff]
    %v245 = vld [vmem:[#allocation10 + $0x130] sm:$0xff]
    %v246 = vld [vmem:[#allocation10 + $0x138] sm:$0xff]
    %v247 = vld [vmem:[#allocation10 + $0x140] sm:$0xff]
    %v248 = vld [vmem:[#allocation10 + $0x148] sm:$0xff]
    %v249 = vld [vmem:[#allocation10 + $0x150] sm:$0xff]
    %v250 = vld [vmem:[#allocation10 + $0x158] sm:$0xff]
    %v251 = vld [vmem:[#allocation10 + $0x160] sm:$0xff]
    %v252 = vld [vmem:[#allocation10 + $0x168] sm:$0xff]
    %v253 = vld [vmem:[#allocation10 + $0x170] sm:$0xff]
    %v254 = vld [vmem:[#allocation10 + $0x178] sm:$0xff]
    %v255 = vld [vmem:[%s5] sm:$0x7]
    %v257 = vperm.slane %v255, 0
    %v258 = vperm.slane %v255, 1
    %v259 = vperm.slane %v255, 2
    %263 = vmatpush.msra.mxu0 %v252
    %264 = vmatpush.msra.mxu0 %v249
    %265 = vmatpush.msra.mxu0 %v246
    %266 = vmatpush.msra.mxu0 %v243
    %267 = vmatpush.msra.mxu0 %v240
    %268 = vmatpush.msra.mxu0 %v237
    %269 = vmatpush.msra.mxu0 %v234
    %270 = vmatpush.msra.mxu0 %v231
    %271 = vmatpush.msra.mxu0 %v228
    %272 = vmatpush.msra.mxu0 %v225
    %273 = vmatpush.msra.mxu0 %v222
    %274 = vmatpush.msra.mxu0 %v219
    %275 = vmatpush.msra.mxu0 %v216
    %276 = vmatpush.msra.mxu0 %v213
    %277 = vmatpush.msra.mxu0 %v210
    %278 = vmatpush.msra.mxu0 %v207
    %279 = vmatmul.f32.gmra.mxu0 %v122
    %v280 = vpop.f32.mrf.mxu0
    %v281 = vadd.f32 %v257, %v280
    %282 = vdwg.mxu0
    %283 = vmatpush.msra.mxu0 %v253
    %284 = vmatpush.msra.mxu0 %v250
    %285 = vmatpush.msra.mxu0 %v247
    %286 = vmatpush.msra.mxu0 %v244
    %287 = vmatpush.msra.mxu0 %v241
    %288 = vmatpush.msra.mxu0 %v238
    %289 = vmatpush.msra.mxu0 %v235
    %290 = vmatpush.msra.mxu0 %v232
    %291 = vmatpush.msra.mxu0 %v229
    %292 = vmatpush.msra.mxu0 %v226
    %293 = vmatpush.msra.mxu0 %v223
    %294 = vmatpush.msra.mxu0 %v220
    %295 = vmatpush.msra.mxu0 %v217
    %296 = vmatpush.msra.mxu0 %v214
    %297 = vmatpush.msra.mxu0 %v211
    %298 = vmatpush.msra.mxu0 %v208
    %299 = vmatmul.f32.gmra.mxu0 %v122
    %v300 = vpop.f32.mrf.mxu0
    %v301 = vadd.f32 %v258, %v300
    %302 = vdwg.mxu0
    %303 = vmatpush.msra.mxu0 %v254
    %304 = vmatpush.msra.mxu0 %v251
    %305 = vmatpush.msra.mxu0 %v248
    %306 = vmatpush.msra.mxu0 %v245
    %307 = vmatpush.msra.mxu0 %v242
    %308 = vmatpush.msra.mxu0 %v239
    %309 = vmatpush.msra.mxu0 %v236
    %310 = vmatpush.msra.mxu0 %v233
    %311 = vmatpush.msra.mxu0 %v230
    %312 = vmatpush.msra.mxu0 %v227
    %313 = vmatpush.msra.mxu0 %v224
    %314 = vmatpush.msra.mxu0 %v221
    %315 = vmatpush.msra.mxu0 %v218
    %316 = vmatpush.msra.mxu0 %v215
    %317 = vmatpush.msra.mxu0 %v212
    %318 = vmatpush.msra.mxu0 %v209
    %319 = vmatmul.f32.gmra.mxu0 %v122
    %v320 = vpop.f32.mrf.mxu0
    %v321 = vadd.f32 %v259, %v320
    %322 = vdwg.mxu0
    %v323 = vadd.f32 %v165, %v281
    %v324 = vadd.f32 %v185, %v301
    %v325 = vxor.u32 %v323, 2147483648
    %v326 = vxor.u32 %v324, 2147483648
    %v327 = vmul.f32 %v325, 1.442695
    %v328 = vpow.pop %v327
    %v329 = vmul.f32 %v326, 1.442695
    %v330 = vpow.pop %v329
    %v331 = vadd.f32 %v328, 1.0
    %v332 = vadd.f32 %v330, 1.0
    %v333 = vrcp.pop %v331
    %v334 = vmul.f32 %v331, %v333
    %v335 = vsub.f32 1.0, %v334
    %v336 = vmul.f32 %v333, %v335
    %v337 = vadd.f32 %v333, %v336
    %vm338 = vweird.f32 %v331
    %vm339 = vweird.f32 %v333
    %vm340 = vmor %vm338, %vm339
    %v341 = vsel %vm340, %v333, %v337
    %v342 = vand.u32 2147483647, %v331
    %vm343 = vcmp.eq.f32.partialorder %v342, 8.507059e+37
    %v344 = vand.u32 %v331, 2147483648
    %v345 = vor.u32 1.1754944e-38, %v344
    %v346 = vsel %vm343, %v345, %v341
    %v347 = vmul.f32 1.0, %v346
    %v348 = vrcp.pop %v332
    %v349 = vmul.f32 %v332, %v348
    %v350 = vsub.f32 1.0, %v349
    %v351 = vmul.f32 %v348, %v350
    %v352 = vadd.f32 %v348, %v351
    %vm353 = vweird.f32 %v332
    %vm354 = vweird.f32 %v348
    %vm355 = vmor %vm353, %vm354
    %v356 = vsel %vm355, %v348, %v352
    %v357 = vand.u32 2147483647, %v332
    %vm358 = vcmp.eq.f32.partialorder %v357, 8.507059e+37
    %v359 = vand.u32 %v332, 2147483648
    %v360 = vor.u32 1.1754944e-38, %v359
    %v361 = vsel %vm358, %v360, %v356
    %v362 = vmul.f32 1.0, %v361
    %v363 = vmul.f32 %v347, %v321
    %v364 = vadd.f32 %v205, %v363
    %v365 = vtanh.pop %v364
    %v366 = vsub.f32 1.0, %v362
    %v367 = vmul.f32 %v366, %v365
    %v368 = vmul.f32 %v362, %v122
    %v369 = vadd.f32 %v367, %v368
    %v370 = vld [vmem:[#allocation11] sm:$0xff]
    %v371 = vld [vmem:[#allocation11 + $0x8] sm:$0xff]
    %v372 = vld [vmem:[#allocation11 + $0x10] sm:$0xff]
    %v373 = vld [vmem:[#allocation11 + $0x18] sm:$0xff]
    %v374 = vld [vmem:[#allocation11 + $0x20] sm:$0xff]
    %v375 = vld [vmem:[#allocation11 + $0x28] sm:$0xff]
    %v376 = vld [vmem:[#allocation11 + $0x30] sm:$0xff]
    %v377 = vld [vmem:[#allocation11 + $0x38] sm:$0xff]
    %v378 = vld [vmem:[#allocation11 + $0x40] sm:$0xff]
    %v379 = vld [vmem:[#allocation11 + $0x48] sm:$0xff]
    %v380 = vld [vmem:[#allocation11 + $0x50] sm:$0xff]
    %v381 = vld [vmem:[#allocation11 + $0x58] sm:$0xff]
    %v382 = vld [vmem:[#allocation11 + $0x60] sm:$0xff]
    %v383 = vld [vmem:[#allocation11 + $0x68] sm:$0xff]
    %v384 = vld [vmem:[#allocation11 + $0x70] sm:$0xff]
    %v385 = vld [vmem:[#allocation11 + $0x78] sm:$0xff]
    %v386 = vld [vmem:[%s7] sm:$0x1]
    %v388 = vperm.slane %v386, 0
    %390 = vmatpush.msra.mxu0 %v385
    %391 = vmatpush.msra.mxu0 %v384
    %392 = vmatpush.msra.mxu0 %v383
    %393 = vmatpush.msra.mxu0 %v382
    %394 = vmatpush.msra.mxu0 %v381
    %395 = vmatpush.msra.mxu0 %v380
    %396 = vmatpush.msra.mxu0 %v379
    %397 = vmatpush.msra.mxu0 %v378
    %398 = vmatpush.msra.mxu0 %v377
    %399 = vmatpush.msra.mxu0 %v376
    %400 = vmatpush.msra.mxu0 %v375
    %401 = vmatpush.msra.mxu0 %v374
    %402 = vmatpush.msra.mxu0 %v373
    %403 = vmatpush.msra.mxu0 %v372
    %404 = vmatpush.msra.mxu0 %v371
    %405 = vmatpush.msra.mxu0 %v370
    %406 = vmatmul.f32.gmra.mxu0 %v369
    %v407 = vpop.f32.mrf.mxu0
    %v408 = vadd.f32 %v388, %v407
    %409 = vdwg.mxu0
    %410 = vst [vmem:[#allocation13] sm:$0xff] %v408
    %411 = vst [vmem:[#allocation14] sm:$0xff] %v369
    // Predicated region
    $region58: #{tpu_custom_call.1} parent=1 // pred_check
      _
    $region59: #{tpu_custom_call.1} parent=1 // pred_check_branch
      %413 = sbr.rel (0) target = $region61
    $region60: #{tpu_custom_call.1} parent=1 // pred_region
      %415 = vsyncadd [#allocation4], 0
      %s417 = sshll.u32 [#allocation13], 4
      %s418 = int_to_ptr.vmem [resolvable:$true] %s417
      %s419 = sshll.u32 %s8, 4
      %s420 = int_to_ptr.hbm [resolvable:$true] %s419
      %422 = dma.vmem_to_hbm [thread:$0]  %s418, 128, %s420, [#allocation4]
    $region61: #{tpu_custom_call.1} parent=1 // pred_fallthru
      _
    // Predicated region
    $region62: #{tpu_custom_call.1} parent=1 // pred_check
      _
    $region63: #{tpu_custom_call.1} parent=1 // pred_check_branch
      %424 = sbr.rel (0) target = $region65
    $region64: #{tpu_custom_call.1} parent=1 // pred_region
      %426 = vsyncadd [#allocation15], 0
      %s428 = sshll.u32 [#allocation14], 4
      %s429 = int_to_ptr.vmem [resolvable:$true] %s428
      %s430 = sshll.u32 %s9, 4
      %s431 = int_to_ptr.hbm [resolvable:$true] %s430
      %433 = dma.vmem_to_hbm [thread:$0]  %s429, 128, %s431, [#allocation15]
    $region65: #{tpu_custom_call.1} parent=1 // pred_fallthru
      _
    // Predicated region
    $region66: #{tpu_custom_call.1} parent=1 // pred_check
      _
    $region67: #{tpu_custom_call.1} parent=1 // pred_check_branch
      %435 = sbr.rel (0) target = $region69
    $region68: #{tpu_custom_call.1} parent=1 // pred_region
      %437 = dma.done [#allocation4], 128
    $region69: #{tpu_custom_call.1} parent=1 // pred_fallthru
      _
    // Predicated region
    $region70: #{tpu_custom_call.1} parent=1 // pred_check
      _
    $region71: #{tpu_custom_call.1} parent=1 // pred_check_branch
      %439 = sbr.rel (0) target = $region73
    $region72: #{tpu_custom_call.1} parent=1 // pred_region
      %441 = dma.done [#allocation15], 128
    $region73: #{tpu_custom_call.1} parent=1 // pred_fallthru
      _
    %442 = vsyncpa [#allocation3], 1
    %443 = vsyncpa [#allocation6], 1
    %444 = vsyncpa [#allocation9], 1
    %445 = vsyncpa [#allocation12], 1
    %446 = vsyncpa [#allocation4], 1
    %447 = vsyncpa [#allocation15], 1

</llo_original>
